<compile_context>
chip_gen: v7x
topology: tpu7x:2x2x1
jax: 0.10.0
libtpu: 0.0.40
codegen_flags: <defaults>
</compile_context>

<pallas_src>
import jax
import jax.numpy as jnp
from jax.experimental import pallas as pl
from jax.experimental.pallas import tpu as pltpu


# --------------------------------------------------------------------------
# Pallas kernel: per-pixel softmax cross entropy.
#   logits_ref: (C, R, 128) float
#   target_ref: (R, 128)    int32
#   loss_ref:   (R, 128)    float32   (-log p[target] per pixel)
# --------------------------------------------------------------------------
def _make_ce_kernel(C, unroll_limit=128):
    if C <= unroll_limit:
        # Unrolled class loop: every op is a dense (R, 128) VPU/EUP op,
        # no cross-lane/sublane (XLU) reductions, no materialised log-probs.
        def kernel(logits_ref, target_ref, loss_ref):
            t = target_ref[...]                                    # (R, 128)
            m = logits_ref[0].astype(jnp.float32)                  # running max
            for c in range(1, C):
                m = jnp.maximum(m, logits_ref[c].astype(jnp.float32))
            se = jnp.zeros_like(m)        # sum of exp(z)
            zt = jnp.zeros_like(m)        # z at the target class
            for c in range(C):
                zc = logits_ref[c].astype(jnp.float32) - m
                se = se + jnp.exp(zc)
                zt = jnp.where(t == c, zc, zt)
            loss_ref[...] = jnp.log(se) - zt                       # lse - z_t
        return kernel

    # Fallback for very large class counts: whole-block reductions over C.
    def kernel(logits_ref, target_ref, loss_ref):
        x = logits_ref[...].astype(jnp.float32)                    # (C, R, 128)
        t = target_ref[...]                                        # (R, 128)
        m = jnp.max(x, axis=0, keepdims=True)
        z = x - m
        se = jnp.sum(jnp.exp(z), axis=0)
        cls = jax.lax.broadcasted_iota(jnp.int32, x.shape, dimension=0)
        zt = jnp.sum(jnp.where(cls == t[None], z, 0.0), axis=0)
        loss_ref[...] = jnp.log(se) - zt
    return kernel


# --------------------------------------------------------------------------
# Kernel wrapper: native NCHW layout, pixels tiled in dense (rows, 128) slabs.
# --------------------------------------------------------------------------
def _per_pixel_ce(logits_nchw, target_nhw, *, target_block_bytes=4 << 20):
    """Returns (raw_loss_flat (N*hw_pad,), valid_mask or None)."""
    N, C, H, W = logits_nchw.shape
    HW = H * W
    rows = pl.cdiv(HW, 128)

    dtype_bytes = jnp.dtype(logits_nchw.dtype).itemsize
    # rows-of-128-pixels per block, sized so the logits block is ~4 MiB
    # (fits double-buffered well under v7x's 64 MiB VMEM / 32 MiB scoped).
    r_budget = max(8, (target_block_bytes // (C * 128 * dtype_bytes)) // 8 * 8)
    if rows <= r_budget:
        tile_rows, rows_pad = rows, rows          # single block: full-dim rule
    else:
        tile_rows = r_budget                      # multiple of 8
        rows_pad = pl.cdiv(rows, tile_rows) * tile_rows

    hw_pad = rows_pad * 128
    logits = logits_nchw.reshape(N, C, HW)        # free view, no transpose
    target = target_nhw.reshape(N, HW).astype(jnp.int32)
    if hw_pad != HW:
        # TODO(synk): pad copies logits once in HBM; a remainder-aware edge
        # block would avoid it.  Padded pixels (class 0) are masked downstream.
        logits = jnp.pad(logits, ((0, 0), (0, 0), (0, hw_pad - HW)))
        target = jnp.pad(target, ((0, 0), (0, hw_pad - HW)))
    logits = logits.reshape(N, C, rows_pad, 128)
    target = target.reshape(N, rows_pad, 128)

    out = pl.pallas_call(
        _make_ce_kernel(C),
        out_shape=jax.ShapeDtypeStruct((N, rows_pad, 128), jnp.float32),
        grid_spec=pltpu.PrefetchScalarGridSpec(
            num_scalar_prefetch=0,
            grid=(N, rows_pad // tile_rows),
            in_specs=[
                pl.BlockSpec((None, C, tile_rows, 128),
                             lambda n, p: (n, 0, p, 0)),
                pl.BlockSpec((None, tile_rows, 128),
                             lambda n, p: (n, p, 0)),
            ],
            out_specs=pl.BlockSpec((None, tile_rows, 128),
                                   lambda n, p: (n, p, 0)),
        ),
        compiler_params=pltpu.CompilerParams(
            dimension_semantics=("parallel", "parallel"),
            vmem_limit_bytes=32 * 1024 * 1024),
    )(logits, target)

    raw = out.reshape(N * hw_pad)
    if hw_pad != HW:
        valid = jnp.broadcast_to(
            (jnp.arange(hw_pad) < HW)[None, :], (N, hw_pad)).reshape(-1)
    else:
        valid = None
    return raw, valid


# --------------------------------------------------------------------------
# Shape-static top-k mean: sort once (compiled once per shape), k is traced,
# so the per-iteration annealing of this_p never recompiles anything.
# --------------------------------------------------------------------------
@jax.jit
def _sorted_prefix_mean(raw, k):
    s = jnp.sort(raw)[::-1]                             # descending
    idx = jax.lax.iota(jnp.int32, s.shape[0])
    kept = jnp.where(idx < k, s, jnp.float32(0.0))      # where avoids 0*(-big)
    return jnp.sum(kept) / k.astype(s.dtype)


@jax.jit
def _masked_mean(raw, valid, count):
    return jnp.sum(jnp.where(valid, raw, 0.0)) / count


# --------------------------------------------------------------------------
# BootstrappedCE forward.
# --------------------------------------------------------------------------
def bootstrapped_ce(logits_nchw, target_nhw, it, *, start_warm, end_warm,
                    top_p=0.15):
    """Returns (loss_scalar, this_p) matching the PyTorch module."""
    N, C, H, W = logits_nchw.shape
    num_pixels = N * H * W

    raw, valid = _per_pixel_ce(logits_nchw, target_nhw)

    if it < start_warm:
        if valid is None:
            return jnp.mean(raw), 1.0
        return _masked_mean(raw, valid, jnp.float32(num_pixels)), 1.0

    if it > end_warm:
        this_p = top_p
    else:
        this_p = top_p + (1.0 - top_p) * ((end_warm - it) /
                                          (end_warm - start_warm))

    k = max(1, int(num_pixels * this_p))   # guard k==0 -> NaN mean
    if valid is not None:
        # padded pixels sort below every real (>= 0) CE value; k <= num_pixels
        raw = jnp.where(valid, raw, jnp.float32(-1e30))
    return _sorted_prefix_mean(raw, jnp.int32(k)), this_p


# --------------------------------------------------------------------------
if __name__ == "__main__":
    key = jax.random.PRNGKey(0)
    k_logits, k_target = jax.random.split(key)

    N, C, H, W = 2, 4, 16, 16          # P = 2*16*16 = 512 pixels
    logits = jax.random.normal(k_logits, (N, C, H, W), dtype=jnp.float32)
    target = jax.random.randint(k_target, (N, H, W), 0, C, dtype=jnp.int32)

    start_warm, end_warm = 10, 20

    # warm phase (plain mean CE)
    loss_warm, p_warm = bootstrapped_ce(
        logits, target, it=5, start_warm=start_warm, end_warm=end_warm)

    # bootstrapped phase (top-p hardest pixels)
    loss_boot, p_boot = bootstrapped_ce(
        logits, target, it=15, start_warm=start_warm, end_warm=end_warm)

    jax.block_until_ready((loss_warm, loss_boot))

    # sanity check against a pure-JAX reference
    logp_ref = jax.nn.log_softmax(
        jnp.transpose(logits, (0, 2, 3, 1)).reshape(-1, C), axis=-1)
    raw_ref = -jnp.take_along_axis(
        logp_ref, target.reshape(-1, 1), axis=-1).reshape(-1)
    ref_warm = jnp.mean(raw_ref)
    k = max(1, int(raw_ref.shape[0] * p_boot))
    ref_boot = jnp.mean(jax.lax.top_k(raw_ref, k)[0])

    assert jnp.allclose(loss_warm, ref_warm, atol=1e-4, rtol=1e-5), (loss_warm, ref_warm)
    assert jnp.allclose(loss_boot, ref_boot, atol=1e-4, rtol=1e-5), (loss_boot, ref_boot)
    assert p_warm == 1.0
    assert abs(p_boot - 0.575) < 1e-12

    print("KERNEL_OK")
</pallas_src>

<mosaic_0001>
module attributes {stable_mosaic.version = 11 : i64} {
  func.func @kernel(%arg0: i32, %arg1: i32, %arg2: memref<1x4x2x128xf32, #tpu.memory_space<vmem>>, %arg3: memref<1x2x128xi32, #tpu.memory_space<vmem>>, %arg4: memref<1x2x128xf32, #tpu.memory_space<vmem>>) attributes {dimension_semantics = [#tpu.dimension_semantics<parallel>, #tpu.dimension_semantics<parallel>], iteration_bounds = array<i64: 2, 1>, scalar_prefetch = 0 : i64, scratch_operands = 0 : i64, tpu.core_type = #tpu.core_type<tc>, window_params = [{transform_indices = @transform_0, window_bounds = array<i64: 1, 4, 2, 128>}, {transform_indices = @transform_1, window_bounds = array<i64: 1, 2, 128>}, {transform_indices = @transform_2, window_bounds = array<i64: 1, 2, 128>}]} {
    %c0 = arith.constant 0 : index
    %c0_0 = arith.constant 0 : index
    %c0_1 = arith.constant 0 : index
    %0 = vector.load %arg3[%c0, %c0_0, %c0_1] : memref<1x2x128xi32, #tpu.memory_space<vmem>>, vector<1x2x128xi32>
    %1 = vector.shape_cast %0 : vector<1x2x128xi32> to vector<2x128xi32>
    %c0_2 = arith.constant 0 : index
    %c0_3 = arith.constant 0 : index
    %c0_4 = arith.constant 0 : index
    %c0_5 = arith.constant 0 : index
    %2 = vector.load %arg2[%c0_2, %c0_3, %c0_4, %c0_5] : memref<1x4x2x128xf32, #tpu.memory_space<vmem>>, vector<1x1x2x128xf32>
    %3 = vector.shape_cast %2 : vector<1x1x2x128xf32> to vector<2x128xf32>
    %c0_6 = arith.constant 0 : index
    %c1 = arith.constant 1 : index
    %c0_7 = arith.constant 0 : index
    %c0_8 = arith.constant 0 : index
    %4 = vector.load %arg2[%c0_6, %c1, %c0_7, %c0_8] : memref<1x4x2x128xf32, #tpu.memory_space<vmem>>, vector<1x1x2x128xf32>
    %5 = vector.shape_cast %4 : vector<1x1x2x128xf32> to vector<2x128xf32>
    %6 = arith.maximumf %3, %5 : vector<2x128xf32>
    %c0_9 = arith.constant 0 : index
    %c2 = arith.constant 2 : index
    %c0_10 = arith.constant 0 : index
    %c0_11 = arith.constant 0 : index
    %7 = vector.load %arg2[%c0_9, %c2, %c0_10, %c0_11] : memref<1x4x2x128xf32, #tpu.memory_space<vmem>>, vector<1x1x2x128xf32>
    %8 = vector.shape_cast %7 : vector<1x1x2x128xf32> to vector<2x128xf32>
    %9 = arith.maximumf %6, %8 : vector<2x128xf32>
    %c0_12 = arith.constant 0 : index
    %c3 = arith.constant 3 : index
    %c0_13 = arith.constant 0 : index
    %c0_14 = arith.constant 0 : index
    %10 = vector.load %arg2[%c0_12, %c3, %c0_13, %c0_14] : memref<1x4x2x128xf32, #tpu.memory_space<vmem>>, vector<1x1x2x128xf32>
    %11 = vector.shape_cast %10 : vector<1x1x2x128xf32> to vector<2x128xf32>
    %12 = arith.maximumf %9, %11 : vector<2x128xf32>
    %cst = arith.constant 0.000000e+00 : f32
    %13 = vector.broadcast %cst : f32 to vector<2x128xf32>
    %cst_15 = arith.constant 0.000000e+00 : f32
    %14 = vector.broadcast %cst_15 : f32 to vector<2x128xf32>
    %c0_16 = arith.constant 0 : index
    %c0_17 = arith.constant 0 : index
    %c0_18 = arith.constant 0 : index
    %c0_19 = arith.constant 0 : index
    %15 = vector.load %arg2[%c0_16, %c0_17, %c0_18, %c0_19] : memref<1x4x2x128xf32, #tpu.memory_space<vmem>>, vector<1x1x2x128xf32>
    %16 = vector.shape_cast %15 : vector<1x1x2x128xf32> to vector<2x128xf32>
    %17 = arith.subf %16, %12 : vector<2x128xf32>
    %18 = math.exp %17 : vector<2x128xf32>
    %19 = arith.addf %13, %18 : vector<2x128xf32>
    %c0_i32 = arith.constant 0 : i32
    %20 = vector.broadcast %c0_i32 : i32 to vector<2x128xi32>
    %21 = arith.cmpi eq, %1, %20 : vector<2x128xi32>
    %22 = arith.select %21, %17, %14 : vector<2x128xi1>, vector<2x128xf32>
    %c0_20 = arith.constant 0 : index
    %c1_21 = arith.constant 1 : index
    %c0_22 = arith.constant 0 : index
    %c0_23 = arith.constant 0 : index
    %23 = vector.load %arg2[%c0_20, %c1_21, %c0_22, %c0_23] : memref<1x4x2x128xf32, #tpu.memory_space<vmem>>, vector<1x1x2x128xf32>
    %24 = vector.shape_cast %23 : vector<1x1x2x128xf32> to vector<2x128xf32>
    %25 = arith.subf %24, %12 : vector<2x128xf32>
    %26 = math.exp %25 : vector<2x128xf32>
    %27 = arith.addf %19, %26 : vector<2x128xf32>
    %c1_i32 = arith.constant 1 : i32
    %28 = vector.broadcast %c1_i32 : i32 to vector<2x128xi32>
    %29 = arith.cmpi eq, %1, %28 : vector<2x128xi32>
    %30 = arith.select %29, %25, %22 : vector<2x128xi1>, vector<2x128xf32>
    %c0_24 = arith.constant 0 : index
    %c2_25 = arith.constant 2 : index
    %c0_26 = arith.constant 0 : index
    %c0_27 = arith.constant 0 : index
    %31 = vector.load %arg2[%c0_24, %c2_25, %c0_26, %c0_27] : memref<1x4x2x128xf32, #tpu.memory_space<vmem>>, vector<1x1x2x128xf32>
    %32 = vector.shape_cast %31 : vector<1x1x2x128xf32> to vector<2x128xf32>
    %33 = arith.subf %32, %12 : vector<2x128xf32>
    %34 = math.exp %33 : vector<2x128xf32>
    %35 = arith.addf %27, %34 : vector<2x128xf32>
    %c2_i32 = arith.constant 2 : i32
    %36 = vector.broadcast %c2_i32 : i32 to vector<2x128xi32>
    %37 = arith.cmpi eq, %1, %36 : vector<2x128xi32>
    %38 = arith.select %37, %33, %30 : vector<2x128xi1>, vector<2x128xf32>
    %c0_28 = arith.constant 0 : index
    %c3_29 = arith.constant 3 : index
    %c0_30 = arith.constant 0 : index
    %c0_31 = arith.constant 0 : index
    %39 = vector.load %arg2[%c0_28, %c3_29, %c0_30, %c0_31] : memref<1x4x2x128xf32, #tpu.memory_space<vmem>>, vector<1x1x2x128xf32>
    %40 = vector.shape_cast %39 : vector<1x1x2x128xf32> to vector<2x128xf32>
    %41 = arith.subf %40, %12 : vector<2x128xf32>
    %42 = math.exp %41 : vector<2x128xf32>
    %43 = arith.addf %35, %42 : vector<2x128xf32>
    %c3_i32 = arith.constant 3 : i32
    %44 = vector.broadcast %c3_i32 : i32 to vector<2x128xi32>
    %45 = arith.cmpi eq, %1, %44 : vector<2x128xi32>
    %46 = arith.select %45, %41, %38 : vector<2x128xi1>, vector<2x128xf32>
    %47 = math.log %43 : vector<2x128xf32>
    %48 = arith.subf %47, %46 : vector<2x128xf32>
    %c0_32 = arith.constant 0 : index
    %c0_33 = arith.constant 0 : index
    %c0_34 = arith.constant 0 : index
    %49 = vector.load %arg4[%c0_32, %c0_33, %c0_34] : memref<1x2x128xf32, #tpu.memory_space<vmem>>, vector<1x2x128xf32>
    %50 = vector.shape_cast %49 : vector<1x2x128xf32> to vector<2x128xf32>
    %51 = vector.shape_cast %48 : vector<2x128xf32> to vector<1x2x128xf32>
    tpu.vector_store %arg4[%c0_32, %c0_33, %c0_34], %51 {strides = array<i32>} : memref<1x2x128xf32, #tpu.memory_space<vmem>>, vector<1x2x128xf32>,
    return
  }
  func.func @transform_0(%arg0: i32, %arg1: i32) -> (i32, i32, i32, i32) {
    %c0_i32 = arith.constant 0 : i32
    %c0_i32_0 = arith.constant 0 : i32
    %c0_i32_1 = arith.constant 0 : i32
    return %arg0, %c0_i32, %arg1, %c0_i32_0 : i32, i32, i32, i32
  }
  func.func @transform_1(%arg0: i32, %arg1: i32) -> (i32, i32, i32) {
    %c0_i32 = arith.constant 0 : i32
    %c0_i32_0 = arith.constant 0 : i32
    return %arg0, %arg1, %c0_i32 : i32, i32, i32
  }
  func.func @transform_2(%arg0: i32, %arg1: i32) -> (i32, i32, i32) {
    %c0_i32 = arith.constant 0 : i32
    %c0_i32_0 = arith.constant 0 : i32
    return %arg0, %arg1, %c0_i32 : i32, i32, i32
  }
}

</mosaic_0001>

<llo_original>
// kernel: tpu_custom_call.1
$region0: #{tpu_custom_call.1}
  #allocation0 [shape = 'u32[]', space=smem, size = 0x4, offset = 0x4, fixed_abs, tag = 'smem constant byte address 0x4 - core index']
  #allocation1 [shape = 'u32[144,128]{1,0:T(1,128)}', space=vmem, size = 0x12000, scoped, tag = 'internal scratch']
  %s0 = inlined_call_operand.hbm [shape: f32[2,4,2,128], index: 0, kind: input, shape index: {}]
  %s1 = inlined_call_operand.hbm [shape: s32[2,2,128], index: 1, kind: input, shape index: {}]
  %s2 = inlined_call_operand.hbm [shape: f32[2,2,128], index: 2, kind: output, shape index: {}]
  %s3 = sld [smem:[#allocation0]]
  $region49: #{tpu_custom_call.1} parent=0
    _
  %s5 = ssub.s32 1, %s3
  %s6 = scalar_select 0, %s5, %s3
  $region1: #{tpu_custom_call.1} parent=0
    #allocation2 [shape = 'u8[8192]{0}', space=vmem, size = 0x2000, scoped, tag = 'input window, operand 0']
    #allocation3 [shape = 's32[2]{0}', space=sflag, size = 0x8, scoped, tag = 'scoped memory for tpu_custom_call.1']
    #allocation4 [shape = 's32[2]{0}', space=sflag, size = 0x8, scoped, tag = 'scoped memory for tpu_custom_call.1']
    #allocation5 [shape = 'u8[2048]{0}', space=vmem, size = 0x800, scoped, tag = 'input window, operand 1']
    #allocation6 [shape = 's32[2]{0}', space=sflag, size = 0x8, scoped, tag = 'scoped memory for tpu_custom_call.1']
    #allocation7 [shape = 'u8[2048]{0}', space=vmem, size = 0x800, scoped, tag = 'output window, operand 0']
    %7 = vsyncpa [#allocation3], 0
    %s8 = scalar_lea.sflag [#allocation3], 1
    %9 = vsyncpa %s8, 0
    %10 = vsyncpa [#allocation6], 0
    %s11 = scalar_lea.sflag [#allocation6], 1
    %12 = vsyncpa %s11, 0
    %13 = vsyncpa [#allocation4], 0
    %s14 = scalar_lea.sflag [#allocation4], 1
    %15 = vsyncpa %s14, 0
    loop: start=0, step=1, limit=4
    $region2: #{tpu_custom_call.1} parent=1 // loop_pre_header
      _
    $region3: #{tpu_custom_call.1} parent=1 // loop_header
      %s17 = sphi 0, %s21
      %p18 = scmp.ge.s32.totalorder %s17, 4
      %s24 = sphi 0, %s36
      %s25 = sphi 0, %s32
      %s26 = sphi 0, %s24
      %s27 = sphi 0, %s25
      %s28 = sphi 0, %s26
      %s29 = sphi 0, %s27
      %s41 = sphi 0, %s43
      %s44 = sphi 0, %s41
      %s45 = sphi 0, %s44
      %s61 = sphi 0, %s45
      %s69 = sphi 0, %s71
      %s72 = sphi 0, %s69
      %s73 = sphi 0, %s72
      %s89 = sphi 0, %s73
      %s97 = sphi 0, %s99
      %s100 = sphi 0, %s97
      %s101 = sphi 0, %s100
      %s117 = sphi 0, %s101
    $region4: #{tpu_custom_call.1} parent=1 // loop_header_branch
      %20 = sbr.rel (%p18) target = $region8
    $region5: #{tpu_custom_call.1} parent=1 // loop_body
      %s22 = ssub.s32 %s17, 1
      %s23 = ssub.s32 %s17, 2
      %s30 = sadd.s32 1, %s25
      %p31 = scmp.ge.s32.totalorder %s30, 1
      %s32 = scalar_select %p31, 0, %s30
      %s33 = sadd.s32 1, %s24
      %s34 = scalar_select %p31, %s33, %s24
      %p35 = scmp.ge.s32.totalorder %s34, 2
      %s36 = scalar_select %p35, 0, %s34
      %s37 = ssub.s32 %s24, %s36
      %s38 = ssub.s32 %s25, %s32
      %s39 = sor.u32 %s37, %s38
      %p40 = scmp.eq.s32.totalorder %s39, 0
      %s42 = sadd.s32 %s41, 1
      %s43 = scalar_select %p40, %s41, %s42
      %p46 = pneg %p40
      %p47 = scmp.eq.s32.totalorder %s17, 1
      %p48 = por %p46, %p47
      %p49 = scmp.ne.s32.totalorder %s41, %s44
      %p50 = scmp.eq.s32.totalorder %s17, 0
      %p51 = por %p49, %p50
      %p52 = scmp.ne.s32.totalorder %s41, %s44
      %p53 = scmp.eq.s32.totalorder %s22, 1
      %p54 = por %p52, %p53
      %p55 = scmp.ne.s32.totalorder %s44, %s45
      %p56 = scmp.eq.s32.totalorder %s22, 0
      %p57 = por %p55, %p56
      %p58 = scmp.ne.s32.totalorder %s44, %s45
      %p59 = scmp.eq.s32.totalorder %s23, 1
      %p60 = por %p58, %p59
      %p62 = scmp.ne.s32.totalorder %s45, %s61
      %p63 = scmp.eq.s32.totalorder %s23, 0
      %p64 = por %p62, %p63
      %s65 = ssub.s32 %s24, %s36
      %s66 = ssub.s32 %s25, %s32
      %s67 = sor.u32 %s65, %s66
      %p68 = scmp.eq.s32.totalorder %s67, 0
      %s70 = sadd.s32 %s69, 1
      %s71 = scalar_select %p68, %s69, %s70
      %p74 = pneg %p68
      %p75 = scmp.eq.s32.totalorder %s17, 1
      %p76 = por %p74, %p75
      %p77 = scmp.ne.s32.totalorder %s69, %s72
      %p78 = scmp.eq.s32.totalorder %s17, 0
      %p79 = por %p77, %p78
      %p80 = scmp.ne.s32.totalorder %s69, %s72
      %p81 = scmp.eq.s32.totalorder %s22, 1
      %p82 = por %p80, %p81
      %p83 = scmp.ne.s32.totalorder %s72, %s73
      %p84 = scmp.eq.s32.totalorder %s22, 0
      %p85 = por %p83, %p84
      %p86 = scmp.ne.s32.totalorder %s72, %s73
      %p87 = scmp.eq.s32.totalorder %s23, 1
      %p88 = por %p86, %p87
      %p90 = scmp.ne.s32.totalorder %s73, %s89
      %p91 = scmp.eq.s32.totalorder %s23, 0
      %p92 = por %p90, %p91
      %s93 = ssub.s32 %s24, %s36
      %s94 = ssub.s32 %s25, %s32
      %s95 = sor.u32 %s93, %s94
      %p96 = scmp.eq.s32.totalorder %s95, 0
      %s98 = sadd.s32 %s97, 1
      %s99 = scalar_select %p96, %s97, %s98
      %p102 = pneg %p96
      %p103 = scmp.eq.s32.totalorder %s17, 1
      %p104 = por %p102, %p103
      %p105 = scmp.ne.s32.totalorder %s97, %s100
      %p106 = scmp.eq.s32.totalorder %s17, 0
      %p107 = por %p105, %p106
      %p108 = scmp.ne.s32.totalorder %s97, %s100
      %p109 = scmp.eq.s32.totalorder %s22, 1
      %p110 = por %p108, %p109
      %p111 = scmp.ne.s32.totalorder %s100, %s101
      %p112 = scmp.eq.s32.totalorder %s22, 0
      %p113 = por %p111, %p112
      %p114 = scmp.ne.s32.totalorder %s100, %s101
      %p115 = scmp.eq.s32.totalorder %s23, 1
      %p116 = por %p114, %p115
      %p118 = scmp.ne.s32.totalorder %s101, %s117
      %p119 = scmp.eq.s32.totalorder %s23, 0
      %p120 = por %p118, %p119
      %p121 = scmp.le.s32.totalorder 1, %s17
      %p122 = scmp.lt.s32.totalorder %s17, 3
      %p123 = pnand %p121, %p122
      %p124 = pneg %p123
      // Predicated region
      $region9: #{tpu_custom_call.1} parent=5 // pred_check
        _
      $region10: #{tpu_custom_call.1} parent=5 // pred_check_branch
        %126 = sbr.rel (%p123) target = $region12
      $region11: #{tpu_custom_call.1} parent=5 // pred_region
        %s127 = ssub.s32 %s17, 1
      $region12: #{tpu_custom_call.1} parent=5 // pred_fallthru
        _
      %p128 = scmp.lt.s32.totalorder %s17, 2
      // Predicated region
      $region13: #{tpu_custom_call.1} parent=5 // pred_check
        %p129 = pneg %p128
      $region14: #{tpu_custom_call.1} parent=5 // pred_check_branch
        %131 = sbr.rel (%p129) target = $region16
      $region15: #{tpu_custom_call.1} parent=5 // pred_region
        // Predicated region
        $region17: #{tpu_custom_call.1} parent=15 // pred_check
          %p132 = pneg %p51
        $region18: #{tpu_custom_call.1} parent=15 // pred_check_branch
          %134 = sbr.rel (%p132) target = $region20
        $region19: #{tpu_custom_call.1} parent=15 // pred_region
          %s135 = sand.u32 %s41, 1
          %s136 = scalar_lea.sflag [#allocation3], %s135
          %s137 = sand.u32 %s41, 1
          %s138 = smul.addr %s137, 8
          %s139 = scalar_lea.vmem [#allocation2], %s138
          %s141 = ssub.s32 128, 128
          %142 = vsyncadd %s136, %s141
          %s143 = smul.addr %s24, 4
          %s144 = sadd.s32 %s25, %s143
          %s145 = smul.addr %s144, 32
          %s146 = scalar_lea.hbm %s0, %s145
          %s147 = sshll.u32 %s139, 4
          %s148 = int_to_ptr.vmem [resolvable:$true] %s147
          %153 = dma.hbm_to_vmem [thread:$0]  %s146, 128, %s148, %s136, 32, 32, 2
        $region20: #{tpu_custom_call.1} parent=15 // pred_fallthru
          _
        // Predicated region
        $region21: #{tpu_custom_call.1} parent=15 // pred_check
          %p154 = pneg %p79
        $region22: #{tpu_custom_call.1} parent=15 // pred_check_branch
          %156 = sbr.rel (%p154) target = $region24
        $region23: #{tpu_custom_call.1} parent=15 // pred_region
          %s157 = sand.u32 %s69, 1
          %s158 = scalar_lea.sflag [#allocation6], %s157
          %s159 = sand.u32 %s69, 1
          %s160 = smul.addr %s159, 2
          %s161 = scalar_lea.vmem [#allocation5], %s160
          %s163 = ssub.s32 32, 32
          %164 = vsyncadd %s158, %s163
          %s165 = sadd.s32 %s25, %s24
          %s166 = smul.addr %s165, 32
          %s167 = scalar_lea.hbm %s1, %s166
          %s169 = sshll.u32 %s161, 4
          %s170 = int_to_ptr.vmem [resolvable:$true] %s169
          %172 = dma.hbm_to_vmem [thread:$0]  %s167, 32, %s170, %s158
        $region24: #{tpu_custom_call.1} parent=15 // pred_fallthru
          _
      $region16: #{tpu_custom_call.1} parent=5 // pred_fallthru
        _
      %p173 = scmp.le.s32.totalorder 1, %s17
      %p174 = scmp.lt.s32.totalorder %s17, 3
      %p175 = pnand %p173, %p174
      %p176 = pneg %p175
      // Predicated region
      $region25: #{tpu_custom_call.1} parent=5 // pred_check
        _
      $region26: #{tpu_custom_call.1} parent=5 // pred_check_branch
        %178 = sbr.rel (%p175) target = $region28
      $region27: #{tpu_custom_call.1} parent=5 // pred_region
        %s179 = ssub.s32 %s17, 1
        %s180 = sand.u32 %s44, 1
        %s181 = scalar_lea.sflag [#allocation3], %s180
        %s182 = sand.u32 %s44, 1
        %s183 = smul.addr %s182, 8
        %s184 = scalar_lea.vmem [#allocation2], %s183
        // Predicated region
        $region29: #{tpu_custom_call.1} parent=27 // pred_check
          %p185 = pneg %p57
        $region30: #{tpu_custom_call.1} parent=27 // pred_check_branch
          %187 = sbr.rel (%p185) target = $region32
        $region31: #{tpu_custom_call.1} parent=27 // pred_region
          %188 = dma.done %s181, 128
        $region32: #{tpu_custom_call.1} parent=27 // pred_fallthru
          _
        %s189 = sand.u32 %s72, 1
        %s190 = scalar_lea.sflag [#allocation6], %s189
        %s191 = sand.u32 %s72, 1
        %s192 = smul.addr %s191, 2
        %s193 = scalar_lea.vmem [#allocation5], %s192
        // Predicated region
        $region33: #{tpu_custom_call.1} parent=27 // pred_check
          %p194 = pneg %p85
        $region34: #{tpu_custom_call.1} parent=27 // pred_check_branch
          %196 = sbr.rel (%p194) target = $region36
        $region35: #{tpu_custom_call.1} parent=27 // pred_region
          %197 = dma.done %s190, 32
        $region36: #{tpu_custom_call.1} parent=27 // pred_fallthru
          _
        %s198 = sand.u32 %s44, 1
        %s199 = scalar_lea.sflag [#allocation3], %s198
        %s200 = sand.u32 %s44, 1
        %s201 = smul.addr %s200, 8
        %s202 = scalar_lea.vmem [#allocation2], %s201
        %p203 = pneg %p57
        %p204 = pneg %p54
        %s205 = sand.u32 %s72, 1
        %s206 = scalar_lea.sflag [#allocation6], %s205
        %s207 = sand.u32 %s72, 1
        %s208 = smul.addr %s207, 2
        %s209 = scalar_lea.vmem [#allocation5], %s208
        %p210 = pneg %p85
        %p211 = pneg %p82
        %p212 = pneg %p113
        %p213 = pneg %p110
        %s214 = sand.u32 %s100, 1
        %s215 = scalar_lea.sflag [#allocation4], %s214
        %s216 = sand.u32 %s100, 1
        %s217 = smul.addr %s216, 2
        %s218 = scalar_lea.vmem [#allocation7], %s217
        %v219 = vld [vmem:[%s193] sm:$0x3]
        %v220 = vld [vmem:[%s184] sm:$0x3]
        %s221 = scalar_lea.vmem %s184, 2 [#allocation2]
        %v222 = vld [vmem:[%s221] sm:$0x3]
        %v223 = vmax.f32 %v220, %v222
        %s224 = scalar_lea.vmem %s184, 4 [#allocation2]
        %v225 = vld [vmem:[%s224] sm:$0x3]
        %v226 = vmax.f32 %v223, %v225
        %s227 = scalar_lea.vmem %s184, 6 [#allocation2]
        %v228 = vld [vmem:[%s227] sm:$0x3]
        %v229 = vmax.f32 %v226, %v228
        %v230 = vsub.f32 %v220, %v229
        %v231 = vmul.f32 %v230, 1.442695
        %v232 = vpow.pop %v231
        %v233 = vadd.f32 %v232, 0.0
        %vm234 = vcmp.eq.s32.totalorder %v219, 0
        %v235 = vsel %vm234, %v230, 0.0
        %v236 = vsub.f32 %v222, %v229
        %v237 = vmul.f32 %v236, 1.442695
        %v238 = vpow.pop %v237
        %v239 = vadd.f32 %v233, %v238
        %vm240 = vcmp.eq.s32.totalorder %v219, 1
        %v241 = vsel %vm240, %v236, %v235
        %v242 = vsub.f32 %v225, %v229
        %v243 = vmul.f32 %v242, 1.442695
        %v244 = vpow.pop %v243
        %v245 = vadd.f32 %v239, %v244
        %vm246 = vcmp.eq.s32.totalorder %v219, 2
        %v247 = vsel %vm246, %v242, %v241
        %v248 = vsub.f32 %v228, %v229
        %v249 = vmul.f32 %v248, 1.442695
        %v250 = vpow.pop %v249
        %v251 = vadd.f32 %v245, %v250
        %vm252 = vcmp.eq.s32.totalorder %v219, 3
        %v253 = vsel %vm252, %v248, %v247
        %v254 = vlog2.pop %v251
        %v255 = vmul.f32 %v254, 0.6931472
        %v256 = vsub.f32 %v255, %v253
        %257 = vst [vmem:[%s218] sm:$0x3] %v256
        %s258 = sand.u32 %s100, 1
        %s259 = scalar_lea.sflag [#allocation4], %s258
        %s260 = sand.u32 %s100, 1
        %s261 = smul.addr %s260, 2
        %s262 = scalar_lea.vmem [#allocation7], %s261
        // Predicated region
        $region37: #{tpu_custom_call.1} parent=27 // pred_check
          %p263 = pneg %p110
        $region38: #{tpu_custom_call.1} parent=27 // pred_check_branch
          %265 = sbr.rel (%p263) target = $region40
        $region39: #{tpu_custom_call.1} parent=27 // pred_region
          %s267 = ssub.s32 32, 32
          %268 = vsyncadd %s259, %s267
          %s269 = sadd.s32 %s27, %s26
          %s270 = smul.addr %s269, 32
          %s271 = scalar_lea.hbm %s2, %s270
          %s273 = sshll.u32 %s262, 4
          %s274 = int_to_ptr.vmem [resolvable:$true] %s273
          %276 = dma.vmem_to_hbm [thread:$0]  %s274, 32, %s271, %s259
        $region40: #{tpu_custom_call.1} parent=27 // pred_fallthru
          _
      $region28: #{tpu_custom_call.1} parent=5 // pred_fallthru
        _
      %p277 = scmp.le.s32.totalorder 2, %s17
      // Predicated region
      $region41: #{tpu_custom_call.1} parent=5 // pred_check
        %p278 = pneg %p277
      $region42: #{tpu_custom_call.1} parent=5 // pred_check_branch
        %280 = sbr.rel (%p278) target = $region44
      $region43: #{tpu_custom_call.1} parent=5 // pred_region
        %s281 = ssub.s32 %s17, 2
        // Predicated region
        $region45: #{tpu_custom_call.1} parent=43 // pred_check
          %p282 = pneg %p116
        $region46: #{tpu_custom_call.1} parent=43 // pred_check_branch
          %284 = sbr.rel (%p282) target = $region48
        $region47: #{tpu_custom_call.1} parent=43 // pred_region
          %s285 = sand.u32 %s101, 1
          %s286 = scalar_lea.sflag [#allocation4], %s285
          %s287 = sand.u32 %s101, 1
          %s288 = smul.addr %s287, 2
          %s289 = scalar_lea.vmem [#allocation7], %s288
          %290 = dma.done %s286, 32
        $region48: #{tpu_custom_call.1} parent=43 // pred_fallthru
          _
      $region44: #{tpu_custom_call.1} parent=5 // pred_fallthru
        _
    $region6: #{tpu_custom_call.1} parent=1 // loop_footer
      %s21 = sadd.s32 1, %s17
    $region7: #{tpu_custom_call.1} parent=1 // loop_footer_branch
      %16 = sbr.rel target = $region3
    $region8: #{tpu_custom_call.1} parent=1 // loop_exit
      _
    %291 = vsyncpa [#allocation3], 1
    %s292 = scalar_lea.sflag [#allocation3], 1
    %293 = vsyncpa %s292, 1
    %294 = vsyncpa [#allocation6], 1
    %s295 = scalar_lea.sflag [#allocation6], 1
    %296 = vsyncpa %s295, 1
    %297 = vsyncpa [#allocation4], 1
    %s298 = scalar_lea.sflag [#allocation4], 1
    %299 = vsyncpa %s298, 1

</llo_original>
